<compile_context>
chip_gen: v7x
topology: tpu7x:2x2x1
jax: 0.10.0
libtpu: 0.0.40
codegen_flags: <defaults>
</compile_context>

<pallas_src>
import functools

import jax
import jax.numpy as jnp
import numpy as np
from jax.experimental import pallas as pl
from jax.experimental.pallas import tpu as pltpu


def _round_up(x, m):
    return (x + m - 1) // m * m


def relation_attention_kernel(x_ref, w_ref, b_ref, v_ref, out_ref, *,
                              query_chunk, tanh_dtype, contract_on_mxu):
    """One grid step: a block of BB batches, all queries and all keys.

    x_ref  : (BB, L, H)        hidden states (H unpadded; matmul K dim is free)
    w_ref  : (H, 2*Ap)         fused pre-transposed [w_ta.T | w_ja.T], lane-padded
    b_ref  : (1, Ap)           bias, zero-padded
    v_ref  : (1, Ap) / (Ap, 1) v, zero-padded ((Ap, 1) iff contract_on_mxu)
    out_ref: (BB, L, L)        softmax attention
    """
    BB, L, H = x_ref.shape
    Ap = b_ref.shape[-1]

    # One fused MXU matmul for both projections; no in-kernel transpose.
    x = x_ref[...].reshape(BB * L, H)
    proj = jnp.dot(x, w_ref[...], preferred_element_type=jnp.float32)   # (BB*L, 2*Ap)

    ta = proj[:, :Ap].reshape(BB, L, Ap).astype(tanh_dtype)
    # Bias folded into ja once (BB*L*Ap adds, not BB*L*L*Ap inside the cube).
    ja = (proj[:, Ap:] + b_ref[...]).reshape(BB, L, Ap).astype(tanh_dtype)

    if contract_on_mxu:
        v_col = v_ref[...].astype(tanh_dtype)                        # (Ap, 1)
    else:
        v4 = v_ref[...].astype(jnp.float32).reshape(1, 1, 1, Ap)     # hoisted

    ja_b = ja[:, None, :, :]                                         # (BB, 1, L, Ap)

    def softmax_rows(i0, ic):
        # Only a (BB, ic, L, Ap) slab of the (L, L, A) cube is ever live.
        cube = jnp.tanh(ta[:, i0:i0 + ic, None, :] + ja_b)
        if contract_on_mxu:
            # A-reduction on the MXU (idle after the projection matmul), taking
            # it off the VPU multiply + XLU lane-reduce slots.
            # TODO(synk): validate the (..., 1)-result reshape/relayout lowering
            # and cost with a bundle dump at large L before enabling by default.
            s = jnp.dot(cube.reshape(BB * ic * L, Ap), v_col,
                        preferred_element_type=jnp.float32).reshape(BB, ic, L)
        else:
            s = jnp.sum(cube.astype(jnp.float32) * v4, axis=-1)      # (BB, ic, L)
        # Query chunking keeps full key rows, so the numerically-stable softmax
        # finishes per chunk — no scores staging buffer / online softmax needed.
        m = jnp.max(s, axis=-1, keepdims=True)
        e = jnp.exp(s - m)
        denom = jnp.sum(e, axis=-1, keepdims=True)
        # reciprocal-multiply: BB*ic divides instead of BB*ic*L.
        return (e * pl.reciprocal(denom, approx=False)).astype(out_ref.dtype)

    qc = min(query_chunk, L)
    if L <= qc:
        out_ref[...] = softmax_rows(0, L)
    else:
        # Chunks are written straight into the output VMEM block: no lane-axis
        # concatenate, no extra scratch; sublane-aligned, full-lane-width stores.
        for i0 in range(0, L, qc):
            ic = min(qc, L - i0)
            out_ref[:, i0:i0 + ic, :] = softmax_rows(i0, ic)
    # TODO(synk): for very large L, move the query chunk onto a "parallel" grid
    # axis, pad/mask keys to a multiple of 128 so the output store is lane-dense,
    # and replace the static Python chunk loop with lax.fori_loop so live ranges
    # stay bounded.


def _choose_blocking(B, L, H, Ap, x_bytes, tanh_bytes, batch_block, query_chunk,
                     vmem_budget_bytes):
    """Pick (batch block BB, in-kernel query chunk QC).

    * v7x megacore: prefer >=2 grid steps on the "parallel" axis when each step
      still has >= ~256 rows, so the ~0.35 us/step pipeline overhead amortizes.
    * Shrink QC, then BB, until the per-step VMEM working set fits the budget
      (v7x has only 64 MiB physical VMEM; v5e's default scoped limit is 16 MiB).
    * Note: where the problem allows, BB*L should stay a multiple of the MXU
      tile height (256 on v6e/v7x) so the projection matmul fills MXU rows.
    """
    def live_bytes(bb, qc):
        qc = min(qc, L)
        x_in = 2 * bb * L * H * x_bytes           # double-buffered input block
        w_in = 2 * H * 2 * Ap * 4                 # fused weights (2 bufs)
        out = 2 * bb * L * L * 4                  # double-buffered output block
        proj = bb * L * 2 * Ap * 4                # ta | ja (f32 accumulate)
        cube = 3 * bb * qc * L * Ap * tanh_bytes  # tanh slab + elementwise temps
        return x_in + w_in + out + proj + cube

    qc = max(8, min(query_chunk, L))
    if batch_block is not None:
        bb = max(1, min(batch_block, B))
    else:
        bb = B
        if B >= 2 and pl.cdiv(B, 2) * L >= 256:   # shard across v7x's 2 TCs
            bb = pl.cdiv(B, 2)
    while live_bytes(bb, qc) > vmem_budget_bytes and qc > 8:
        qc //= 2
    if batch_block is None:
        while live_bytes(bb, qc) > vmem_budget_bytes and bb > 1:
            bb = pl.cdiv(bb, 2)
    return bb, qc, live_bytes(bb, qc)


def relation_attention(x, w_ta, w_ja, b, v, *, tanh_dtype=jnp.float32,
                       batch_block=None, query_chunk=128, contract_on_mxu=False,
                       vmem_budget_bytes=40 * 1024 * 1024):
    B, L, H = x.shape
    A = w_ta.shape[0]
    Ap = _round_up(A, 128)
    f32 = jnp.float32

    # Fused, pre-transposed, lane(N)-padded weights: cols [0:A] = w_ta.T,
    # cols [Ap:Ap+A] = w_ja.T, rest 0.  The K dim (H) stays unpadded — x is
    # passed straight through with no wrapper-side pad/cast HBM pre-pass.
    w_dtype = x.dtype if x.dtype == jnp.bfloat16 else f32
    w_fused = jnp.zeros((H, 2 * Ap), w_dtype)
    w_fused = w_fused.at[:, :A].set(w_ta.astype(w_dtype).T)
    w_fused = w_fused.at[:, Ap:Ap + A].set(w_ja.astype(w_dtype).T)

    b_p = jnp.zeros((1, Ap), f32).at[0, :A].set(b.astype(f32).reshape(-1))
    if contract_on_mxu:
        v_p = jnp.zeros((Ap, 1), f32).at[:A, 0].set(v.astype(f32).reshape(-1))
    else:
        v_p = jnp.zeros((1, Ap), f32).at[0, :A].set(v.astype(f32).reshape(-1))

    BB, QC, live = _choose_blocking(
        B, L, H, Ap, x.dtype.itemsize, jnp.dtype(tanh_dtype).itemsize,
        batch_block, query_chunk, vmem_budget_bytes)

    grid = (pl.cdiv(B, BB),)
    # Explicit scoped-VMEM limit: v5e defaults to only 16 MiB; cap at 48 MiB so
    # we always leave headroom on v7x's 64 MiB physical VMEM.
    vmem_limit = int(min(max(live + live // 4 + (8 << 20), 32 << 20), 48 << 20))

    kernel = functools.partial(relation_attention_kernel, query_chunk=QC,
                               tanh_dtype=tanh_dtype,
                               contract_on_mxu=contract_on_mxu)

    # Note: if BB does not divide B, the final (padded) block computes tanh /
    # exp on unspecified rows; those rows are discarded at writeback and every
    # row's result is independent, so the valid output is unaffected.
    return pl.pallas_call(
        kernel,
        out_shape=jax.ShapeDtypeStruct((B, L, L), f32),
        grid_spec=pltpu.PrefetchScalarGridSpec(
            num_scalar_prefetch=0,
            grid=grid,
            in_specs=[
                pl.BlockSpec((BB, L, H), lambda i: (i, 0, 0)),    # x, unpadded
                pl.BlockSpec((H, 2 * Ap), lambda i: (0, 0)),      # fused weights
                pl.BlockSpec((1, Ap), lambda i: (0, 0)),          # bias
                pl.BlockSpec(v_p.shape, lambda i: (0, 0)),        # v
            ],
            out_specs=pl.BlockSpec((BB, L, L), lambda i: (i, 0, 0)),
        ),
        compiler_params=pltpu.CompilerParams(
            dimension_semantics=("parallel",),
            vmem_limit_bytes=vmem_limit),
    )(x, w_fused, b_p, v_p)


def _xavier_uniform(key, shape, fan_in, fan_out, dtype=jnp.float32):
    bound = float(np.sqrt(6.0 / (fan_in + fan_out)))
    return jax.random.uniform(key, shape, dtype=dtype, minval=-bound, maxval=bound)


def reference(x, w_ta, w_ja, b, v):
    # Pure-JAX reference mirroring the PyTorch forward.
    A = w_ta.shape[0]
    ta = (x @ w_ta.T)[:, :, None, :]                     # (B, L, 1, A)
    ja = (x @ w_ja.T)[:, None, :, :]                     # (B, 1, L, A)
    alpha = jnp.tanh(ta + ja + b.reshape(1, 1, 1, A))    # (B, L, L, A)
    scores = (alpha * v.reshape(1, 1, 1, A)).sum(-1)     # (B, L, L)
    return jax.nn.softmax(scores, axis=-1)


if __name__ == "__main__":
    # Small shapes consistent with the module: B=2, seq L=8, hidden H=32, attn A=32.
    B, L, H, A = 2, 8, 32, 32

    key = jax.random.PRNGKey(0)
    k_x, k_ta, k_ja, k_b, k_v, k_x2 = jax.random.split(key, 6)

    x = jax.random.normal(k_x, (B, L, H), dtype=jnp.float32)

    # Deterministic xavier-uniform init matching the PyTorch __init__ shapes.
    w_ta = _xavier_uniform(k_ta, (A, H), fan_in=H, fan_out=A)
    w_ja = _xavier_uniform(k_ja, (A, H), fan_in=H, fan_out=A)
    b = _xavier_uniform(k_b, (1, 1, 1, A), fan_in=A, fan_out=A)
    v = _xavier_uniform(k_v, (1, A), fan_in=A, fan_out=1)

    # Default path: auto blocking, single query chunk at this tiny L.
    out = relation_attention(x, w_ta, w_ja, b, v)
    out = jax.block_until_ready(out)
    ref = reference(x, w_ta, w_ja, b, v)
    np.testing.assert_allclose(np.asarray(out), np.asarray(ref), rtol=1e-5, atol=1e-5)
    assert out.shape == (B, L, L)

    # Second check: multi-step "parallel" grid with a ragged final batch block
    # and the in-kernel query-chunk loop (2 chunks of 8) exercised.
    B2, L2 = 3, 16
    x2 = jax.random.normal(k_x2, (B2, L2, H), dtype=jnp.float32)
    out2 = relation_attention(x2, w_ta, w_ja, b, v, batch_block=2, query_chunk=8)
    out2 = jax.block_until_ready(out2)
    ref2 = reference(x2, w_ta, w_ja, b, v)
    np.testing.assert_allclose(np.asarray(out2), np.asarray(ref2), rtol=1e-5, atol=1e-5)

    print("KERNEL_OK")
</pallas_src>

<mosaic_0001>
module attributes {stable_mosaic.version = 11 : i64} {
  func.func @relation_attention_kernel(%arg0: i32, %arg1: memref<2x8x32xf32, #tpu.memory_space<vmem>>, %arg2: memref<32x256xf32, #tpu.memory_space<vmem>>, %arg3: memref<1x128xf32, #tpu.memory_space<vmem>>, %arg4: memref<1x128xf32, #tpu.memory_space<vmem>>, %arg5: memref<2x8x8xf32, #tpu.memory_space<vmem>>) attributes {dimension_semantics = [#tpu.dimension_semantics<parallel>], iteration_bounds = array<i64: 1>, scalar_prefetch = 0 : i64, scratch_operands = 0 : i64, tpu.core_type = #tpu.core_type<tc>, window_params = [{transform_indices = @transform_0, window_bounds = array<i64: 2, 8, 32>}, {pipeline_mode = #tpu.pipeline_mode<synchronous>, transform_indices = @transform_1, window_bounds = array<i64: 32, 256>}, {pipeline_mode = #tpu.pipeline_mode<synchronous>, transform_indices = @transform_2, window_bounds = array<i64: 1, 128>}, {pipeline_mode = #tpu.pipeline_mode<synchronous>, transform_indices = @transform_3, window_bounds = array<i64: 1, 128>}, {transform_indices = @transform_4, window_bounds = array<i64: 2, 8, 8>}]} {
    %c0 = arith.constant 0 : index
    %c0_0 = arith.constant 0 : index
    %c0_1 = arith.constant 0 : index
    %0 = vector.load %arg1[%c0, %c0_0, %c0_1] : memref<2x8x32xf32, #tpu.memory_space<vmem>>, vector<2x8x32xf32>
    %1 = vector.shape_cast %0 : vector<2x8x32xf32> to vector<16x32xf32>
    %c0_2 = arith.constant 0 : index
    %c0_3 = arith.constant 0 : index
    %2 = vector.load %arg2[%c0_2, %c0_3] : memref<32x256xf32, #tpu.memory_space<vmem>>, vector<32x256xf32>
    %cst = arith.constant dense<0.000000e+00> : vector<16x256xf32>
    %3 = tpu.matmul %1, %2, %cst {dimension_numbers = #tpu.dot_dimension_numbers<[1], [0], [0], [1], [0, 0, 1, 1], [], []>} : vector<16x32xf32>, vector<32x256xf32>, vector<16x256xf32> -> vector<16x256xf32>
    %4 = vector.extract_strided_slice %3 {offsets = [0, 0], sizes = [16, 128], strides = [1, 1]} : vector<16x256xf32> to vector<16x128xf32>
    %5 = vector.shape_cast %4 : vector<16x128xf32> to vector<2x8x128xf32>
    %6 = vector.extract_strided_slice %3 {offsets = [0, 128], sizes = [16, 128], strides = [1, 1]} : vector<16x256xf32> to vector<16x128xf32>
    %c0_4 = arith.constant 0 : index
    %c0_5 = arith.constant 0 : index
    %7 = vector.load %arg3[%c0_4, %c0_5] : memref<1x128xf32, #tpu.memory_space<vmem>>, vector<1x128xf32>
    %8 = vector.broadcast %7 : vector<1x128xf32> to vector<16x128xf32>
    %9 = arith.addf %6, %8 : vector<16x128xf32>
    %10 = vector.shape_cast %9 : vector<16x128xf32> to vector<2x8x128xf32>
    %c0_6 = arith.constant 0 : index
    %c0_7 = arith.constant 0 : index
    %11 = vector.load %arg4[%c0_6, %c0_7] : memref<1x128xf32, #tpu.memory_space<vmem>>, vector<1x128xf32>
    %12 = vector.shape_cast %11 : vector<1x128xf32> to vector<1x1x1x128xf32>
    %13 = vector.shape_cast %10 : vector<2x8x128xf32> to vector<2x1x8x128xf32>
    %14 = vector.shape_cast %5 : vector<2x8x128xf32> to vector<2x8x1x128xf32>
    %15 = vector.broadcast %14 : vector<2x8x1x128xf32> to vector<2x8x8x128xf32>
    %16 = vector.broadcast %13 : vector<2x1x8x128xf32> to vector<2x8x8x128xf32>
    %17 = arith.addf %15, %16 : vector<2x8x8x128xf32>
    %18 = math.tanh %17 : vector<2x8x8x128xf32>
    %19 = vector.broadcast %12 : vector<1x1x1x128xf32> to vector<2x8x8x128xf32>
    %20 = arith.mulf %18, %19 : vector<2x8x8x128xf32>
    %cst_8 = arith.constant dense<0.000000e+00> : vector<2x8x8xf32>
    %21 = vector.multi_reduction <add>, %20, %cst_8 [3] : vector<2x8x8x128xf32> to vector<2x8x8xf32>
    %cst_9 = arith.constant dense<0xFF800000> : vector<2x8xf32>
    %22 = vector.multi_reduction <maximumf>, %21, %cst_9 [2] : vector<2x8x8xf32> to vector<2x8xf32>
    %23 = vector.shape_cast %22 : vector<2x8xf32> to vector<2x8x1xf32>
    %24 = vector.broadcast %23 : vector<2x8x1xf32> to vector<2x8x8xf32>
    %25 = arith.subf %21, %24 : vector<2x8x8xf32>
    %26 = math.exp %25 : vector<2x8x8xf32>
    %cst_10 = arith.constant dense<0.000000e+00> : vector<2x8xf32>
    %27 = vector.multi_reduction <add>, %26, %cst_10 [2] : vector<2x8x8xf32> to vector<2x8xf32>
    %28 = vector.shape_cast %27 : vector<2x8xf32> to vector<2x8x1xf32>
    %29 = tpu.reciprocal %28 : vector<2x8x1xf32> -> vector<2x8x1xf32>
    %30 = vector.broadcast %29 : vector<2x8x1xf32> to vector<2x8x8xf32>
    %31 = arith.mulf %26, %30 : vector<2x8x8xf32>
    %c0_11 = arith.constant 0 : index
    %c0_12 = arith.constant 0 : index
    %c0_13 = arith.constant 0 : index
    %32 = vector.load %arg5[%c0_11, %c0_12, %c0_13] : memref<2x8x8xf32, #tpu.memory_space<vmem>>, vector<2x8x8xf32>
    tpu.vector_store %arg5[%c0_11, %c0_12, %c0_13], %31 {strides = array<i32>} : memref<2x8x8xf32, #tpu.memory_space<vmem>>, vector<2x8x8xf32>,
    return
  }
  func.func @transform_0(%arg0: i32) -> (i32, i32, i32) {
    %c0_i32 = arith.constant 0 : i32
    %c0_i32_0 = arith.constant 0 : i32
    %c0_i32_1 = arith.constant 0 : i32
    return %arg0, %c0_i32, %c0_i32_0 : i32, i32, i32
  }
  func.func @transform_1(%arg0: i32) -> (i32, i32) {
    %c0_i32 = arith.constant 0 : i32
    %c0_i32_0 = arith.constant 0 : i32
    %c0_i32_1 = arith.constant 0 : i32
    return %c0_i32, %c0_i32_0 : i32, i32
  }
  func.func @transform_2(%arg0: i32) -> (i32, i32) {
    %c0_i32 = arith.constant 0 : i32
    %c0_i32_0 = arith.constant 0 : i32
    %c0_i32_1 = arith.constant 0 : i32
    return %c0_i32, %c0_i32_0 : i32, i32
  }
  func.func @transform_3(%arg0: i32) -> (i32, i32) {
    %c0_i32 = arith.constant 0 : i32
    %c0_i32_0 = arith.constant 0 : i32
    %c0_i32_1 = arith.constant 0 : i32
    return %c0_i32, %c0_i32_0 : i32, i32
  }
  func.func @transform_4(%arg0: i32) -> (i32, i32, i32) {
    %c0_i32 = arith.constant 0 : i32
    %c0_i32_0 = arith.constant 0 : i32
    %c0_i32_1 = arith.constant 0 : i32
    return %arg0, %c0_i32, %c0_i32_0 : i32, i32, i32
  }
}

</mosaic_0001>

<llo_original>
// kernel: tpu_custom_call.1
$region0: #{tpu_custom_call.1}
  #allocation0 [shape = 'u32[]', space=smem, size = 0x4, offset = 0x4, fixed_abs, tag = 'smem constant byte address 0x4 - core index']
  #allocation1 [shape = 'u32[144,128]{1,0:T(1,128)}', space=vmem, size = 0x12000, scoped, tag = 'internal scratch']
  %s0 = inlined_call_operand.hbm [shape: f32[2,8,32], index: 0, kind: input, shape index: {}]
  %s1 = inlined_call_operand.hbm [shape: f32[32,256], index: 1, kind: input, shape index: {}]
  %s2 = inlined_call_operand.vmem [shape: f32[1,128], index: 2, kind: input, shape index: {}]
  %s3 = inlined_call_operand.vmem [shape: f32[1,128], index: 3, kind: input, shape index: {}]
  %s4 = inlined_call_operand.hbm [shape: f32[2,8,8], index: 4, kind: output, shape index: {}]
  %s5 = sld [smem:[#allocation0]]
  $region34: #{tpu_custom_call.1} parent=0
    _
  %s7 = ssub.s32 1, %s5
  %s8 = scalar_select 0, %s7, %s5
  $region1: #{tpu_custom_call.1} parent=0
    #allocation2 [shape = 'u8[8192]{0}', space=vmem, size = 0x2000, scoped, tag = 'input window, operand 0, single buffered']
    #allocation3 [shape = 's32[1]{0}', space=sflag, size = 0x4, scoped, tag = 'scoped memory for tpu_custom_call.1']
    #allocation4 [shape = 's32[1]{0}', space=sflag, size = 0x4, scoped, tag = 'scoped memory for tpu_custom_call.1']
    #allocation5 [shape = 'u8[32768]{0}', space=vmem, size = 0x8000, scoped, tag = 'input window, operand 1, single buffered']
    #allocation6 [shape = 's32[1]{0}', space=sflag, size = 0x4, scoped, tag = 'scoped memory for tpu_custom_call.1']
    #allocation7 [shape = 'u8[8192]{0}', space=vmem, size = 0x2000, scoped, tag = 'output window, operand 0, single buffered']
    %9 = vsyncpa [#allocation3], 0
    %10 = vsyncpa [#allocation6], 0
    %11 = vsyncpa [#allocation4], 0
    // Predicated region
    $region2: #{tpu_custom_call.1} parent=1 // pred_check
      _
    $region3: #{tpu_custom_call.1} parent=1 // pred_check_branch
      %13 = sbr.rel (0) target = $region5
    $region4: #{tpu_custom_call.1} parent=1 // pred_region
      %s15 = ssub.s32 256, 256
      %16 = vsyncadd [#allocation3], %s15
      %s17 = sshll.u32 [#allocation2], 4
      %s18 = int_to_ptr.vmem [resolvable:$true] %s17
      %23 = dma.hbm_to_vmem [thread:$0]  %s0, 256, %s18, [#allocation3], 128, 128, 8
    $region5: #{tpu_custom_call.1} parent=1 // pred_fallthru
      _
    // Predicated region
    $region6: #{tpu_custom_call.1} parent=1 // pred_check
      _
    $region7: #{tpu_custom_call.1} parent=1 // pred_check_branch
      %25 = sbr.rel (0) target = $region9
    $region8: #{tpu_custom_call.1} parent=1 // pred_region
      %s27 = ssub.s32 1024, 1024
      %28 = vsyncadd [#allocation6], %s27
      %s29 = sshll.u32 [#allocation5], 4
      %s30 = int_to_ptr.vmem [resolvable:$true] %s29
      %35 = dma.hbm_to_vmem [thread:$0]  %s1, 1024, %s30, [#allocation6], 256, 256, 16
    $region9: #{tpu_custom_call.1} parent=1 // pred_fallthru
      _
    // Predicated region
    $region10: #{tpu_custom_call.1} parent=1 // pred_check
      _
    $region11: #{tpu_custom_call.1} parent=1 // pred_check_branch
      %37 = sbr.rel (0) target = $region13
    $region12: #{tpu_custom_call.1} parent=1 // pred_region
      _
    $region13: #{tpu_custom_call.1} parent=1 // pred_fallthru
      _
    // Predicated region
    $region14: #{tpu_custom_call.1} parent=1 // pred_check
      _
    $region15: #{tpu_custom_call.1} parent=1 // pred_check_branch
      %39 = sbr.rel (0) target = $region17
    $region16: #{tpu_custom_call.1} parent=1 // pred_region
      _
    $region17: #{tpu_custom_call.1} parent=1 // pred_fallthru
      _
    // Predicated region
    $region18: #{tpu_custom_call.1} parent=1 // pred_check
      _
    $region19: #{tpu_custom_call.1} parent=1 // pred_check_branch
      %41 = sbr.rel (0) target = $region21
    $region20: #{tpu_custom_call.1} parent=1 // pred_region
      %42 = dma.done [#allocation3], 256
    $region21: #{tpu_custom_call.1} parent=1 // pred_fallthru
      _
    // Predicated region
    $region22: #{tpu_custom_call.1} parent=1 // pred_check
      _
    $region23: #{tpu_custom_call.1} parent=1 // pred_check_branch
      %44 = sbr.rel (0) target = $region25
    $region24: #{tpu_custom_call.1} parent=1 // pred_region
      %45 = dma.done [#allocation6], 1024
    $region25: #{tpu_custom_call.1} parent=1 // pred_fallthru
      _
    %v46 = vld [vmem:[#allocation2] sm:$0xff]
    %v47 = vld [vmem:[#allocation2 + $0x8] sm:$0xff]
    %v48 = vld [vmem:[#allocation5] sm:$0xff]
    %v49 = vld [vmem:[#allocation5 + $0x8] sm:$0xff]
    %v50 = vld [vmem:[#allocation5 + $0x10] sm:$0xff]
    %v51 = vld [vmem:[#allocation5 + $0x18] sm:$0xff]
    %v52 = vld [vmem:[#allocation5 + $0x20] sm:$0xff]
    %v53 = vld [vmem:[#allocation5 + $0x28] sm:$0xff]
    %v54 = vld [vmem:[#allocation5 + $0x30] sm:$0xff]
    %v55 = vld [vmem:[#allocation5 + $0x38] sm:$0xff]
    %vm56 = vcmask 261120
    %v58 = vsel %vm56, %v46, 0
    %v61 = vsel %vm56, %v47, 0
    %63 = vmatprep.subr.mxu0 %v49
    %64 = vmatpush1.msra.mxu0 %v48
    %65 = vmatprep.subr.mxu0 %v51
    %66 = vmatpush1.msra.mxu0 %v50
    %67 = vmatprep.subr.mxu0 %v53
    %68 = vmatpush1.msra.mxu0 %v52
    %69 = vmatprep.subr.mxu0 %v55
    %70 = vmatpush1.msra.mxu0 %v54
    %71 = vmatprep.subr.mxu0 0.0
    %72 = vmatpush1.msra.mxu0 0.0
    %73 = vmatprep.subr.mxu0 0.0
    %74 = vmatpush1.msra.mxu0 0.0
    %75 = vmatprep.subr.mxu0 0.0
    %76 = vmatpush1.msra.mxu0 0.0
    %77 = vmatprep.subr.mxu0 0.0
    %78 = vmatpush1.msra.mxu0 0.0
    %79 = vmatprep.subr.mxu0 0.0
    %80 = vmatpush1.msra.mxu0 0.0
    %81 = vmatprep.subr.mxu0 0.0
    %82 = vmatpush1.msra.mxu0 0.0
    %83 = vmatprep.subr.mxu0 0.0
    %84 = vmatpush1.msra.mxu0 0.0
    %85 = vmatprep.subr.mxu0 0.0
    %86 = vmatpush1.msra.mxu0 0.0
    %87 = vmatprep.subr.mxu0 0.0
    %88 = vmatpush1.msra.mxu0 0.0
    %89 = vmatprep.subr.mxu0 0.0
    %90 = vmatpush1.msra.mxu0 0.0
    %91 = vmatprep.subr.mxu0 0.0
    %92 = vmatpush1.msra.mxu0 0.0
    %93 = vmatprep.subr.mxu0 0.0
    %94 = vmatpush1.msra.mxu0 0.0
    %95 = vmatprep.subr.mxu0 0.0
    %96 = vmatpush1.msra.mxu0 0.0
    %97 = vmatprep.subr.mxu0 0.0
    %98 = vmatpush1.msra.mxu0 0.0
    %99 = vmatprep.subr.mxu0 0.0
    %100 = vmatpush1.msra.mxu0 0.0
    %101 = vmatprep.subr.mxu0 0.0
    %102 = vmatpush1.msra.mxu0 0.0
    %103 = vmatprep.subr.mxu0 0.0
    %104 = vmatpush1.msra.mxu0 0.0
    %105 = vmatprep.subr.mxu0 0.0
    %106 = vmatpush1.msra.mxu0 0.0
    %107 = vmatprep.subr.mxu0 0.0
    %108 = vmatpush1.msra.mxu0 0.0
    %109 = vmatprep.subr.mxu0 0.0
    %110 = vmatpush1.msra.mxu0 0.0
    %111 = vmatprep.subr.mxu0 0.0
    %112 = vmatpush1.msra.mxu0 0.0
    %113 = vmatprep.subr.mxu0 0.0
    %114 = vmatpush1.msra.mxu0 0.0
    %115 = vmatprep.subr.mxu0 0.0
    %116 = vmatpush1.msra.mxu0 0.0
    %117 = vmatprep.subr.mxu0 0.0
    %118 = vmatpush1.msra.mxu0 0.0
    %119 = vmatprep.subr.mxu0 0.0
    %120 = vmatpush1.msra.mxu0 0.0
    %121 = vmatprep.subr.mxu0 0.0
    %122 = vmatpush1.msra.mxu0 0.0
    %123 = vmatprep.subr.mxu0 0.0
    %124 = vmatpush1.msra.mxu0 0.0
    %125 = vmatprep.subr.mxu0 0.0
    %126 = vmatpush1.msra.mxu0 0.0
    %127 = vmatprep.mubr.f32.mxu0 0.0
    %128 = vmatmul.mubr.f32.gmra.mrb[0].mxu0 %v58
    %v129 = vpop.f32.mrb[0].mxu0
    %v130 = vadd.f32 0.0, %v129
    %v131 = vpop.f32.mrb[0].mxu0
    %v132 = vadd.f32 0.0, %v131
    %133 = vmatprep.mubr.f32.mxu0 0.0
    %134 = vmatmul.mubr.f32.gmra.mrb[0].mxu0 %v61
    %v135 = vpop.f32.mrb[0].mxu0
    %v136 = vadd.f32 0.0, %v135
    %v137 = vpop.f32.mrb[0].mxu0
    %v138 = vadd.f32 0.0, %v137
    %139 = vdwg.mxu0
    %v140 = vld [vmem:[%s2] sm:$0x1]
    %v142 = vlaneseq
    %v143 = vshrl.u32 %v142, 7
    %v144 = vsub.s32 0, %v143
    %v145 = vrot.slane %v140, %v144
    %v147 = vadd.f32 %v132, %v145
    %v148 = vadd.f32 %v138, %v145
    %v149 = vld [vmem:[%s3] sm:$0x1]
    %v152 = vcombine.high %v130, %v130
    %v154 = vunpack.c.l.s4 1966171168
    %v155 = vunpack.c.0.s8 %v154
    %v156 = vlaneseq
    %v157 = vshrl.u32 %v156, 7
    %v158 = vsub.s32 %v155, %v157
    %v159 = vrot.slane %v130, %v158
    %v161 = vunpack.c.l.s4 1966171168
    %v162 = vunpack.c.0.s8 %v161
    %v163 = vlaneseq
    %v164 = vshrl.u32 %v163, 7
    %v165 = vsub.s32 %v162, %v164
    %v166 = vrot.slane %v152, %v165
    %v167 = vcombine.high %v159, %v159
    %v168 = vcombine.high %v166, %v166
    %v170 = vunpack.c.l.s4 1966171168
    %v171 = vunpack.c.0.s8 %v170
    %v172 = vlaneseq
    %v173 = vshrl.u32 %v172, 7
    %v174 = vsub.s32 %v171, %v173
    %v175 = vrot.slane %v159, %v174
    %v177 = vunpack.c.l.s4 1966171168
    %v178 = vunpack.c.0.s8 %v177
    %v179 = vlaneseq
    %v180 = vshrl.u32 %v179, 7
    %v181 = vsub.s32 %v178, %v180
    %v182 = vrot.slane %v166, %v181
    %v184 = vunpack.c.l.s4 1966171168
    %v185 = vunpack.c.0.s8 %v184
    %v186 = vlaneseq
    %v187 = vshrl.u32 %v186, 7
    %v188 = vsub.s32 %v185, %v187
    %v189 = vrot.slane %v167, %v188
    %v191 = vunpack.c.l.s4 1966171168
    %v192 = vunpack.c.0.s8 %v191
    %v193 = vlaneseq
    %v194 = vshrl.u32 %v193, 7
    %v195 = vsub.s32 %v192, %v194
    %v196 = vrot.slane %v168, %v195
    %v197 = vcombine.high %v175, %v175
    %v198 = vcombine.high %v182, %v182
    %v199 = vcombine.high %v189, %v189
    %v200 = vcombine.high %v196, %v196
    %v201 = vcombine.high %v136, %v136
    %v203 = vunpack.c.l.s4 1966171168
    %v204 = vunpack.c.0.s8 %v203
    %v205 = vlaneseq
    %v206 = vshrl.u32 %v205, 7
    %v207 = vsub.s32 %v204, %v206
    %v208 = vrot.slane %v136, %v207
    %v210 = vunpack.c.l.s4 1966171168
    %v211 = vunpack.c.0.s8 %v210
    %v212 = vlaneseq
    %v213 = vshrl.u32 %v212, 7
    %v214 = vsub.s32 %v211, %v213
    %v215 = vrot.slane %v201, %v214
    %v216 = vcombine.high %v208, %v208
    %v217 = vcombine.high %v215, %v215
    %v219 = vunpack.c.l.s4 1966171168
    %v220 = vunpack.c.0.s8 %v219
    %v221 = vlaneseq
    %v222 = vshrl.u32 %v221, 7
    %v223 = vsub.s32 %v220, %v222
    %v224 = vrot.slane %v208, %v223
    %v226 = vunpack.c.l.s4 1966171168
    %v227 = vunpack.c.0.s8 %v226
    %v228 = vlaneseq
    %v229 = vshrl.u32 %v228, 7
    %v230 = vsub.s32 %v227, %v229
    %v231 = vrot.slane %v215, %v230
    %v233 = vunpack.c.l.s4 1966171168
    %v234 = vunpack.c.0.s8 %v233
    %v235 = vlaneseq
    %v236 = vshrl.u32 %v235, 7
    %v237 = vsub.s32 %v234, %v236
    %v238 = vrot.slane %v216, %v237
    %v240 = vunpack.c.l.s4 1966171168
    %v241 = vunpack.c.0.s8 %v240
    %v242 = vlaneseq
    %v243 = vshrl.u32 %v242, 7
    %v244 = vsub.s32 %v241, %v243
    %v245 = vrot.slane %v217, %v244
    %v246 = vcombine.high %v224, %v224
    %v247 = vcombine.high %v231, %v231
    %v248 = vcombine.high %v238, %v238
    %v249 = vcombine.high %v245, %v245
    %v250 = vlaneseq
    %v251 = vshrl.u32 %v250, 7
    %v252 = vsub.s32 0, %v251
    %v253 = vrot.slane %v175, %v252
    %v254 = vlaneseq
    %v255 = vshrl.u32 %v254, 7
    %v256 = vsub.s32 0, %v255
    %v257 = vrot.slane %v189, %v256
    %v258 = vlaneseq
    %v259 = vshrl.u32 %v258, 7
    %v260 = vsub.s32 0, %v259
    %v261 = vrot.slane %v197, %v260
    %v262 = vlaneseq
    %v263 = vshrl.u32 %v262, 7
    %v264 = vsub.s32 0, %v263
    %v265 = vrot.slane %v199, %v264
    %v266 = vlaneseq
    %v267 = vshrl.u32 %v266, 7
    %v268 = vsub.s32 0, %v267
    %v269 = vrot.slane %v182, %v268
    %v270 = vlaneseq
    %v271 = vshrl.u32 %v270, 7
    %v272 = vsub.s32 0, %v271
    %v273 = vrot.slane %v196, %v272
    %v274 = vlaneseq
    %v275 = vshrl.u32 %v274, 7
    %v276 = vsub.s32 0, %v275
    %v277 = vrot.slane %v198, %v276
    %v278 = vlaneseq
    %v279 = vshrl.u32 %v278, 7
    %v280 = vsub.s32 0, %v279
    %v281 = vrot.slane %v200, %v280
    %v282 = vlaneseq
    %v283 = vshrl.u32 %v282, 7
    %v284 = vsub.s32 0, %v283
    %v285 = vrot.slane %v224, %v284
    %v286 = vlaneseq
    %v287 = vshrl.u32 %v286, 7
    %v288 = vsub.s32 0, %v287
    %v289 = vrot.slane %v238, %v288
    %v290 = vlaneseq
    %v291 = vshrl.u32 %v290, 7
    %v292 = vsub.s32 0, %v291
    %v293 = vrot.slane %v246, %v292
    %v294 = vlaneseq
    %v295 = vshrl.u32 %v294, 7
    %v296 = vsub.s32 0, %v295
    %v297 = vrot.slane %v248, %v296
    %v298 = vlaneseq
    %v299 = vshrl.u32 %v298, 7
    %v300 = vsub.s32 0, %v299
    %v301 = vrot.slane %v231, %v300
    %v302 = vlaneseq
    %v303 = vshrl.u32 %v302, 7
    %v304 = vsub.s32 0, %v303
    %v305 = vrot.slane %v245, %v304
    %v306 = vlaneseq
    %v307 = vshrl.u32 %v306, 7
    %v308 = vsub.s32 0, %v307
    %v309 = vrot.slane %v247, %v308
    %v310 = vlaneseq
    %v311 = vshrl.u32 %v310, 7
    %v312 = vsub.s32 0, %v311
    %v313 = vrot.slane %v249, %v312
    %v330 = vadd.f32 %v253, %v147
    %v331 = vadd.f32 %v257, %v147
    %v332 = vadd.f32 %v261, %v147
    %v333 = vadd.f32 %v265, %v147
    %v334 = vadd.f32 %v269, %v147
    %v335 = vadd.f32 %v273, %v147
    %v336 = vadd.f32 %v277, %v147
    %v337 = vadd.f32 %v281, %v147
    %v338 = vadd.f32 %v285, %v148
    %v339 = vadd.f32 %v289, %v148
    %v340 = vadd.f32 %v293, %v148
    %v341 = vadd.f32 %v297, %v148
    %v342 = vadd.f32 %v301, %v148
    %v343 = vadd.f32 %v305, %v148
    %v344 = vadd.f32 %v309, %v148
    %v345 = vadd.f32 %v313, %v148
    %v346 = vtanh.pop %v330
    %v347 = vtanh.pop %v331
    %v348 = vtanh.pop %v332
    %v349 = vtanh.pop %v333
    %v350 = vtanh.pop %v334
    %v351 = vtanh.pop %v335
    %v352 = vtanh.pop %v336
    %v353 = vtanh.pop %v337
    %v354 = vtanh.pop %v338
    %v355 = vtanh.pop %v339
    %v356 = vtanh.pop %v340
    %v357 = vtanh.pop %v341
    %v358 = vtanh.pop %v342
    %v359 = vtanh.pop %v343
    %v360 = vtanh.pop %v344
    %v361 = vtanh.pop %v345
    %v363 = vlaneseq
    %v364 = vshrl.u32 %v363, 7
    %v365 = vsub.s32 0, %v364
    %v366 = vrot.slane %v149, %v365
    %v368 = vmul.f32 %v346, %v366
    %v369 = vmul.f32 %v347, %v366
    %v370 = vmul.f32 %v348, %v366
    %v371 = vmul.f32 %v349, %v366
    %v372 = vmul.f32 %v350, %v366
    %v373 = vmul.f32 %v351, %v366
    %v374 = vmul.f32 %v352, %v366
    %v375 = vmul.f32 %v353, %v366
    %v376 = vmul.f32 %v354, %v366
    %v377 = vmul.f32 %v355, %v366
    %v378 = vmul.f32 %v356, %v366
    %v379 = vmul.f32 %v357, %v366
    %v380 = vmul.f32 %v358, %v366
    %v381 = vmul.f32 %v359, %v366
    %v382 = vmul.f32 %v360, %v366
    %v383 = vmul.f32 %v361, %v366
    %384 = vadd.xlane.f32.xlu0 %v368
    %v385 = vpop.xlane.xlu0 %384
    %386 = vadd.xlane.f32.xlu0 %v369
    %v387 = vpop.xlane.xlu0 %386
    %388 = vadd.xlane.f32.xlu0 %v370
    %v389 = vpop.xlane.xlu0 %388
    %390 = vadd.xlane.f32.xlu0 %v371
    %v391 = vpop.xlane.xlu0 %390
    %392 = vadd.xlane.f32.xlu0 %v372
    %v393 = vpop.xlane.xlu0 %392
    %394 = vadd.xlane.f32.xlu0 %v373
    %v395 = vpop.xlane.xlu0 %394
    %396 = vadd.xlane.f32.xlu0 %v374
    %v397 = vpop.xlane.xlu0 %396
    %398 = vadd.xlane.f32.xlu0 %v375
    %v399 = vpop.xlane.xlu0 %398
    %400 = vadd.xlane.f32.xlu0 %v376
    %v401 = vpop.xlane.xlu0 %400
    %402 = vadd.xlane.f32.xlu0 %v377
    %v403 = vpop.xlane.xlu0 %402
    %404 = vadd.xlane.f32.xlu0 %v378
    %v405 = vpop.xlane.xlu0 %404
    %406 = vadd.xlane.f32.xlu0 %v379
    %v407 = vpop.xlane.xlu0 %406
    %408 = vadd.xlane.f32.xlu0 %v380
    %v409 = vpop.xlane.xlu0 %408
    %410 = vadd.xlane.f32.xlu0 %v381
    %v411 = vpop.xlane.xlu0 %410
    %412 = vadd.xlane.f32.xlu0 %v382
    %v413 = vpop.xlane.xlu0 %412
    %414 = vadd.xlane.f32.xlu0 %v383
    %v415 = vpop.xlane.xlu0 %414
    %v432 = vlaneseq
    %v433 = vand.u32 %v432, 127
    %v434 = vlaneseq
    %v435 = vshrl.u32 %v434, 7
    %v436 = vsub.s32 %v433, %v435
    %v437 = vrot.slane %v385, %v436
    %v438 = vlaneseq
    %v439 = vshrl.u32 %v438, 7
    %v440 = vsub.s32 %v433, %v439
    %v441 = vrot.slane %v387, %v440
    %v442 = vlaneseq
    %v443 = vshrl.u32 %v442, 7
    %v444 = vsub.s32 %v433, %v443
    %v445 = vrot.slane %v389, %v444
    %v446 = vlaneseq
    %v447 = vshrl.u32 %v446, 7
    %v448 = vsub.s32 %v433, %v447
    %v449 = vrot.slane %v391, %v448
    %v450 = vlaneseq
    %v451 = vshrl.u32 %v450, 7
    %v452 = vsub.s32 %v433, %v451
    %v453 = vrot.slane %v393, %v452
    %v454 = vlaneseq
    %v455 = vshrl.u32 %v454, 7
    %v456 = vsub.s32 %v433, %v455
    %v457 = vrot.slane %v395, %v456
    %v458 = vlaneseq
    %v459 = vshrl.u32 %v458, 7
    %v460 = vsub.s32 %v433, %v459
    %v461 = vrot.slane %v397, %v460
    %v462 = vlaneseq
    %v463 = vshrl.u32 %v462, 7
    %v464 = vsub.s32 %v433, %v463
    %v465 = vrot.slane %v399, %v464
    %v466 = vlaneseq
    %v467 = vshrl.u32 %v466, 7
    %v468 = vsub.s32 %v433, %v467
    %v469 = vrot.slane %v401, %v468
    %v470 = vlaneseq
    %v471 = vshrl.u32 %v470, 7
    %v472 = vsub.s32 %v433, %v471
    %v473 = vrot.slane %v403, %v472
    %v474 = vlaneseq
    %v475 = vshrl.u32 %v474, 7
    %v476 = vsub.s32 %v433, %v475
    %v477 = vrot.slane %v405, %v476
    %v478 = vlaneseq
    %v479 = vshrl.u32 %v478, 7
    %v480 = vsub.s32 %v433, %v479
    %v481 = vrot.slane %v407, %v480
    %v482 = vlaneseq
    %v483 = vshrl.u32 %v482, 7
    %v484 = vsub.s32 %v433, %v483
    %v485 = vrot.slane %v409, %v484
    %v486 = vlaneseq
    %v487 = vshrl.u32 %v486, 7
    %v488 = vsub.s32 %v433, %v487
    %v489 = vrot.slane %v411, %v488
    %v490 = vlaneseq
    %v491 = vshrl.u32 %v490, 7
    %v492 = vsub.s32 %v433, %v491
    %v493 = vrot.slane %v413, %v492
    %v494 = vlaneseq
    %v495 = vshrl.u32 %v494, 7
    %v496 = vsub.s32 %v433, %v495
    %v497 = vrot.slane %v415, %v496
    %vm498 = vcmask 1041409
    %v499 = vsel %vm498, %v441, %v437
    %vm500 = vcmask 1042434
    %v501 = vsel %vm500, %v445, %v499
    %vm502 = vcmask 1043459
    %v503 = vsel %vm502, %v449, %v501
    %vm504 = vcmask 1044484
    %v505 = vsel %vm504, %v453, %v503
    %vm506 = vcmask 1045509
    %v507 = vsel %vm506, %v457, %v505
    %vm508 = vcmask 1046534
    %v509 = vsel %vm508, %v461, %v507
    %vm510 = vcmask 1047559
    %v511 = vsel %vm510, %v465, %v509
    %v512 = vsel %vm498, %v473, %v469
    %v513 = vsel %vm500, %v477, %v512
    %v514 = vsel %vm502, %v481, %v513
    %v515 = vsel %vm504, %v485, %v514
    %v516 = vsel %vm506, %v489, %v515
    %v517 = vsel %vm508, %v493, %v516
    %v518 = vsel %vm510, %v497, %v517
    %vm521 = vcmask 64512
    %v522 = vsel %vm521, %v511, -inf
    %523 = vmax.xlane.f32.xlu0 %v522
    %v524 = vpop.xlane.xlu0 %523
    %v525 = vsel %vm521, %v518, -inf
    %526 = vmax.xlane.f32.xlu0 %v525
    %v527 = vpop.xlane.xlu0 %526
    %v530 = vlaneseq
    %v531 = vshrl.u32 %v530, 7
    %v532 = vsub.s32 0, %v531
    %v533 = vrot.slane %v524, %v532
    %v534 = vlaneseq
    %v535 = vshrl.u32 %v534, 7
    %v536 = vsub.s32 1, %v535
    %v537 = vrot.slane %v524, %v536
    %v538 = vlaneseq
    %v539 = vshrl.u32 %v538, 7
    %v540 = vsub.s32 2, %v539
    %v541 = vrot.slane %v524, %v540
    %v542 = vlaneseq
    %v543 = vshrl.u32 %v542, 7
    %v544 = vsub.s32 3, %v543
    %v545 = vrot.slane %v524, %v544
    %v546 = vlaneseq
    %v547 = vshrl.u32 %v546, 7
    %v548 = vsub.s32 4, %v547
    %v549 = vrot.slane %v524, %v548
    %v550 = vlaneseq
    %v551 = vshrl.u32 %v550, 7
    %v552 = vsub.s32 5, %v551
    %v553 = vrot.slane %v524, %v552
    %v554 = vlaneseq
    %v555 = vshrl.u32 %v554, 7
    %v556 = vsub.s32 6, %v555
    %v557 = vrot.slane %v524, %v556
    %v558 = vlaneseq
    %v559 = vshrl.u32 %v558, 7
    %v560 = vsub.s32 7, %v559
    %v561 = vrot.slane %v524, %v560
    %v562 = vlaneseq
    %v563 = vshrl.u32 %v562, 7
    %v564 = vsub.s32 0, %v563
    %v565 = vrot.slane %v527, %v564
    %v566 = vlaneseq
    %v567 = vshrl.u32 %v566, 7
    %v568 = vsub.s32 1, %v567
    %v569 = vrot.slane %v527, %v568
    %v570 = vlaneseq
    %v571 = vshrl.u32 %v570, 7
    %v572 = vsub.s32 2, %v571
    %v573 = vrot.slane %v527, %v572
    %v574 = vlaneseq
    %v575 = vshrl.u32 %v574, 7
    %v576 = vsub.s32 3, %v575
    %v577 = vrot.slane %v527, %v576
    %v578 = vlaneseq
    %v579 = vshrl.u32 %v578, 7
    %v580 = vsub.s32 4, %v579
    %v581 = vrot.slane %v527, %v580
    %v582 = vlaneseq
    %v583 = vshrl.u32 %v582, 7
    %v584 = vsub.s32 5, %v583
    %v585 = vrot.slane %v527, %v584
    %v586 = vlaneseq
    %v587 = vshrl.u32 %v586, 7
    %v588 = vsub.s32 6, %v587
    %v589 = vrot.slane %v527, %v588
    %v590 = vlaneseq
    %v591 = vshrl.u32 %v590, 7
    %v592 = vsub.s32 7, %v591
    %v593 = vrot.slane %v527, %v592
    %v610 = vsub.f32 %v385, %v533
    %v611 = vsub.f32 %v387, %v537
    %v612 = vsub.f32 %v389, %v541
    %v613 = vsub.f32 %v391, %v545
    %v614 = vsub.f32 %v393, %v549
    %v615 = vsub.f32 %v395, %v553
    %v616 = vsub.f32 %v397, %v557
    %v617 = vsub.f32 %v399, %v561
    %v618 = vsub.f32 %v401, %v565
    %v619 = vsub.f32 %v403, %v569
    %v620 = vsub.f32 %v405, %v573
    %v621 = vsub.f32 %v407, %v577
    %v622 = vsub.f32 %v409, %v581
    %v623 = vsub.f32 %v411, %v585
    %v624 = vsub.f32 %v413, %v589
    %v625 = vsub.f32 %v415, %v593
    %v626 = vmul.f32 %v610, 1.442695
    %v627 = vpow.pop %v626
    %v628 = vmul.f32 %v611, 1.442695
    %v629 = vpow.pop %v628
    %v630 = vmul.f32 %v612, 1.442695
    %v631 = vpow.pop %v630
    %v632 = vmul.f32 %v613, 1.442695
    %v633 = vpow.pop %v632
    %v634 = vmul.f32 %v614, 1.442695
    %v635 = vpow.pop %v634
    %v636 = vmul.f32 %v615, 1.442695
    %v637 = vpow.pop %v636
    %v638 = vmul.f32 %v616, 1.442695
    %v639 = vpow.pop %v638
    %v640 = vmul.f32 %v617, 1.442695
    %v641 = vpow.pop %v640
    %v642 = vmul.f32 %v618, 1.442695
    %v643 = vpow.pop %v642
    %v644 = vmul.f32 %v619, 1.442695
    %v645 = vpow.pop %v644
    %v646 = vmul.f32 %v620, 1.442695
    %v647 = vpow.pop %v646
    %v648 = vmul.f32 %v621, 1.442695
    %v649 = vpow.pop %v648
    %v650 = vmul.f32 %v622, 1.442695
    %v651 = vpow.pop %v650
    %v652 = vmul.f32 %v623, 1.442695
    %v653 = vpow.pop %v652
    %v654 = vmul.f32 %v624, 1.442695
    %v655 = vpow.pop %v654
    %v656 = vmul.f32 %v625, 1.442695
    %v657 = vpow.pop %v656
    %674 = vset.pattern.permute.xlu0 0
    %675 = vperm.xlu0 %674, %v627
    %v676 = vpop.permute.xlu0 %675
    %677 = vset.pattern.permute.xlu0 0
    %678 = vperm.xlu0 %677, %v629
    %v679 = vpop.permute.xlu0 %678
    %680 = vset.pattern.permute.xlu0 0
    %681 = vperm.xlu0 %680, %v631
    %v682 = vpop.permute.xlu0 %681
    %683 = vset.pattern.permute.xlu0 0
    %684 = vperm.xlu0 %683, %v633
    %v685 = vpop.permute.xlu0 %684
    %686 = vset.pattern.permute.xlu0 0
    %687 = vperm.xlu0 %686, %v635
    %v688 = vpop.permute.xlu0 %687
    %689 = vset.pattern.permute.xlu0 0
    %690 = vperm.xlu0 %689, %v637
    %v691 = vpop.permute.xlu0 %690
    %692 = vset.pattern.permute.xlu0 0
    %693 = vperm.xlu0 %692, %v639
    %v694 = vpop.permute.xlu0 %693
    %695 = vset.pattern.permute.xlu0 0
    %696 = vperm.xlu0 %695, %v641
    %v697 = vpop.permute.xlu0 %696
    %698 = vset.pattern.permute.xlu0 0
    %699 = vperm.xlu0 %698, %v643
    %v700 = vpop.permute.xlu0 %699
    %701 = vset.pattern.permute.xlu0 0
    %702 = vperm.xlu0 %701, %v645
    %v703 = vpop.permute.xlu0 %702
    %704 = vset.pattern.permute.xlu0 0
    %705 = vperm.xlu0 %704, %v647
    %v706 = vpop.permute.xlu0 %705
    %707 = vset.pattern.permute.xlu0 0
    %708 = vperm.xlu0 %707, %v649
    %v709 = vpop.permute.xlu0 %708
    %710 = vset.pattern.permute.xlu0 0
    %711 = vperm.xlu0 %710, %v651
    %v712 = vpop.permute.xlu0 %711
    %713 = vset.pattern.permute.xlu0 0
    %714 = vperm.xlu0 %713, %v653
    %v715 = vpop.permute.xlu0 %714
    %716 = vset.pattern.permute.xlu0 0
    %717 = vperm.xlu0 %716, %v655
    %v718 = vpop.permute.xlu0 %717
    %719 = vset.pattern.permute.xlu0 0
    %720 = vperm.xlu0 %719, %v657
    %v721 = vpop.permute.xlu0 %720
    %v722 = vlaneseq
    %v723 = vshrl.u32 %v722, 7
    %v724 = vsub.s32 %v433, %v723
    %v725 = vrot.slane %v676, %v724
    %v726 = vlaneseq
    %v727 = vshrl.u32 %v726, 7
    %v728 = vsub.s32 %v433, %v727
    %v729 = vrot.slane %v679, %v728
    %v730 = vlaneseq
    %v731 = vshrl.u32 %v730, 7
    %v732 = vsub.s32 %v433, %v731
    %v733 = vrot.slane %v682, %v732
    %v734 = vlaneseq
    %v735 = vshrl.u32 %v734, 7
    %v736 = vsub.s32 %v433, %v735
    %v737 = vrot.slane %v685, %v736
    %v738 = vlaneseq
    %v739 = vshrl.u32 %v738, 7
    %v740 = vsub.s32 %v433, %v739
    %v741 = vrot.slane %v688, %v740
    %v742 = vlaneseq
    %v743 = vshrl.u32 %v742, 7
    %v744 = vsub.s32 %v433, %v743
    %v745 = vrot.slane %v691, %v744
    %v746 = vlaneseq
    %v747 = vshrl.u32 %v746, 7
    %v748 = vsub.s32 %v433, %v747
    %v749 = vrot.slane %v694, %v748
    %v750 = vlaneseq
    %v751 = vshrl.u32 %v750, 7
    %v752 = vsub.s32 %v433, %v751
    %v753 = vrot.slane %v697, %v752
    %v754 = vlaneseq
    %v755 = vshrl.u32 %v754, 7
    %v756 = vsub.s32 %v433, %v755
    %v757 = vrot.slane %v700, %v756
    %v758 = vlaneseq
    %v759 = vshrl.u32 %v758, 7
    %v760 = vsub.s32 %v433, %v759
    %v761 = vrot.slane %v703, %v760
    %v762 = vlaneseq
    %v763 = vshrl.u32 %v762, 7
    %v764 = vsub.s32 %v433, %v763
    %v765 = vrot.slane %v706, %v764
    %v766 = vlaneseq
    %v767 = vshrl.u32 %v766, 7
    %v768 = vsub.s32 %v433, %v767
    %v769 = vrot.slane %v709, %v768
    %v770 = vlaneseq
    %v771 = vshrl.u32 %v770, 7
    %v772 = vsub.s32 %v433, %v771
    %v773 = vrot.slane %v712, %v772
    %v774 = vlaneseq
    %v775 = vshrl.u32 %v774, 7
    %v776 = vsub.s32 %v433, %v775
    %v777 = vrot.slane %v715, %v776
    %v778 = vlaneseq
    %v779 = vshrl.u32 %v778, 7
    %v780 = vsub.s32 %v433, %v779
    %v781 = vrot.slane %v718, %v780
    %v782 = vlaneseq
    %v783 = vshrl.u32 %v782, 7
    %v784 = vsub.s32 %v433, %v783
    %v785 = vrot.slane %v721, %v784
    %v786 = vsel %vm498, %v729, %v725
    %v787 = vsel %vm500, %v733, %v786
    %v788 = vsel %vm502, %v737, %v787
    %v789 = vsel %vm504, %v741, %v788
    %v790 = vsel %vm506, %v745, %v789
    %v791 = vsel %vm508, %v749, %v790
    %v792 = vsel %vm510, %v753, %v791
    %v793 = vsel %vm498, %v761, %v757
    %v794 = vsel %vm500, %v765, %v793
    %v795 = vsel %vm502, %v769, %v794
    %v796 = vsel %vm504, %v773, %v795
    %v797 = vsel %vm506, %v777, %v796
    %v798 = vsel %vm508, %v781, %v797
    %v799 = vsel %vm510, %v785, %v798
    %v802 = vsel %vm521, %v792, 0.0
    %803 = vadd.xlane.f32.xlu0 %v802
    %v804 = vpop.xlane.xlu0 %803
    %v805 = vsel %vm521, %v799, 0.0
    %806 = vadd.xlane.f32.xlu0 %v805
    %v807 = vpop.xlane.xlu0 %806
    %v808 = vrcp.pop %v804
    %v809 = vrcp.pop %v807
    %v812 = vlaneseq
    %v813 = vshrl.u32 %v812, 7
    %v814 = vsub.s32 0, %v813
    %v815 = vrot.slane %v808, %v814
    %v816 = vlaneseq
    %v817 = vshrl.u32 %v816, 7
    %v818 = vsub.s32 1, %v817
    %v819 = vrot.slane %v808, %v818
    %v820 = vlaneseq
    %v821 = vshrl.u32 %v820, 7
    %v822 = vsub.s32 2, %v821
    %v823 = vrot.slane %v808, %v822
    %v824 = vlaneseq
    %v825 = vshrl.u32 %v824, 7
    %v826 = vsub.s32 3, %v825
    %v827 = vrot.slane %v808, %v826
    %v828 = vlaneseq
    %v829 = vshrl.u32 %v828, 7
    %v830 = vsub.s32 4, %v829
    %v831 = vrot.slane %v808, %v830
    %v832 = vlaneseq
    %v833 = vshrl.u32 %v832, 7
    %v834 = vsub.s32 5, %v833
    %v835 = vrot.slane %v808, %v834
    %v836 = vlaneseq
    %v837 = vshrl.u32 %v836, 7
    %v838 = vsub.s32 6, %v837
    %v839 = vrot.slane %v808, %v838
    %v840 = vlaneseq
    %v841 = vshrl.u32 %v840, 7
    %v842 = vsub.s32 7, %v841
    %v843 = vrot.slane %v808, %v842
    %v844 = vlaneseq
    %v845 = vshrl.u32 %v844, 7
    %v846 = vsub.s32 0, %v845
    %v847 = vrot.slane %v809, %v846
    %v848 = vlaneseq
    %v849 = vshrl.u32 %v848, 7
    %v850 = vsub.s32 1, %v849
    %v851 = vrot.slane %v809, %v850
    %v852 = vlaneseq
    %v853 = vshrl.u32 %v852, 7
    %v854 = vsub.s32 2, %v853
    %v855 = vrot.slane %v809, %v854
    %v856 = vlaneseq
    %v857 = vshrl.u32 %v856, 7
    %v858 = vsub.s32 3, %v857
    %v859 = vrot.slane %v809, %v858
    %v860 = vlaneseq
    %v861 = vshrl.u32 %v860, 7
    %v862 = vsub.s32 4, %v861
    %v863 = vrot.slane %v809, %v862
    %v864 = vlaneseq
    %v865 = vshrl.u32 %v864, 7
    %v866 = vsub.s32 5, %v865
    %v867 = vrot.slane %v809, %v866
    %v868 = vlaneseq
    %v869 = vshrl.u32 %v868, 7
    %v870 = vsub.s32 6, %v869
    %v871 = vrot.slane %v809, %v870
    %v872 = vlaneseq
    %v873 = vshrl.u32 %v872, 7
    %v874 = vsub.s32 7, %v873
    %v875 = vrot.slane %v809, %v874
    %v892 = vmul.f32 %v627, %v815
    %v893 = vmul.f32 %v629, %v819
    %v894 = vmul.f32 %v631, %v823
    %v895 = vmul.f32 %v633, %v827
    %v896 = vmul.f32 %v635, %v831
    %v897 = vmul.f32 %v637, %v835
    %v898 = vmul.f32 %v639, %v839
    %v899 = vmul.f32 %v641, %v843
    %v900 = vmul.f32 %v643, %v847
    %v901 = vmul.f32 %v645, %v851
    %v902 = vmul.f32 %v647, %v855
    %v903 = vmul.f32 %v649, %v859
    %v904 = vmul.f32 %v651, %v863
    %v905 = vmul.f32 %v653, %v867
    %v906 = vmul.f32 %v655, %v871
    %v907 = vmul.f32 %v657, %v875
    %924 = vset.pattern.permute.xlu0 0
    %925 = vperm.xlu0 %924, %v892
    %v926 = vpop.permute.xlu0 %925
    %927 = vset.pattern.permute.xlu0 0
    %928 = vperm.xlu0 %927, %v893
    %v929 = vpop.permute.xlu0 %928
    %930 = vset.pattern.permute.xlu0 0
    %931 = vperm.xlu0 %930, %v894
    %v932 = vpop.permute.xlu0 %931
    %933 = vset.pattern.permute.xlu0 0
    %934 = vperm.xlu0 %933, %v895
    %v935 = vpop.permute.xlu0 %934
    %936 = vset.pattern.permute.xlu0 0
    %937 = vperm.xlu0 %936, %v896
    %v938 = vpop.permute.xlu0 %937
    %939 = vset.pattern.permute.xlu0 0
    %940 = vperm.xlu0 %939, %v897
    %v941 = vpop.permute.xlu0 %940
    %942 = vset.pattern.permute.xlu0 0
    %943 = vperm.xlu0 %942, %v898
    %v944 = vpop.permute.xlu0 %943
    %945 = vset.pattern.permute.xlu0 0
    %946 = vperm.xlu0 %945, %v899
    %v947 = vpop.permute.xlu0 %946
    %948 = vset.pattern.permute.xlu0 0
    %949 = vperm.xlu0 %948, %v900
    %v950 = vpop.permute.xlu0 %949
    %951 = vset.pattern.permute.xlu0 0
    %952 = vperm.xlu0 %951, %v901
    %v953 = vpop.permute.xlu0 %952
    %954 = vset.pattern.permute.xlu0 0
    %955 = vperm.xlu0 %954, %v902
    %v956 = vpop.permute.xlu0 %955
    %957 = vset.pattern.permute.xlu0 0
    %958 = vperm.xlu0 %957, %v903
    %v959 = vpop.permute.xlu0 %958
    %960 = vset.pattern.permute.xlu0 0
    %961 = vperm.xlu0 %960, %v904
    %v962 = vpop.permute.xlu0 %961
    %963 = vset.pattern.permute.xlu0 0
    %964 = vperm.xlu0 %963, %v905
    %v965 = vpop.permute.xlu0 %964
    %966 = vset.pattern.permute.xlu0 0
    %967 = vperm.xlu0 %966, %v906
    %v968 = vpop.permute.xlu0 %967
    %969 = vset.pattern.permute.xlu0 0
    %970 = vperm.xlu0 %969, %v907
    %v971 = vpop.permute.xlu0 %970
    %v972 = vlaneseq
    %v973 = vshrl.u32 %v972, 7
    %v974 = vsub.s32 %v433, %v973
    %v975 = vrot.slane %v926, %v974
    %v976 = vlaneseq
    %v977 = vshrl.u32 %v976, 7
    %v978 = vsub.s32 %v433, %v977
    %v979 = vrot.slane %v929, %v978
    %v980 = vlaneseq
    %v981 = vshrl.u32 %v980, 7
    %v982 = vsub.s32 %v433, %v981
    %v983 = vrot.slane %v932, %v982
    %v984 = vlaneseq
    %v985 = vshrl.u32 %v984, 7
    %v986 = vsub.s32 %v433, %v985
    %v987 = vrot.slane %v935, %v986
    %v988 = vlaneseq
    %v989 = vshrl.u32 %v988, 7
    %v990 = vsub.s32 %v433, %v989
    %v991 = vrot.slane %v938, %v990
    %v992 = vlaneseq
    %v993 = vshrl.u32 %v992, 7
    %v994 = vsub.s32 %v433, %v993
    %v995 = vrot.slane %v941, %v994
    %v996 = vlaneseq
    %v997 = vshrl.u32 %v996, 7
    %v998 = vsub.s32 %v433, %v997
    %v999 = vrot.slane %v944, %v998
    %v1000 = vlaneseq
    %v1001 = vshrl.u32 %v1000, 7
    %v1002 = vsub.s32 %v433, %v1001
    %v1003 = vrot.slane %v947, %v1002
    %v1004 = vlaneseq
    %v1005 = vshrl.u32 %v1004, 7
    %v1006 = vsub.s32 %v433, %v1005
    %v1007 = vrot.slane %v950, %v1006
    %v1008 = vlaneseq
    %v1009 = vshrl.u32 %v1008, 7
    %v1010 = vsub.s32 %v433, %v1009
    %v1011 = vrot.slane %v953, %v1010
    %v1012 = vlaneseq
    %v1013 = vshrl.u32 %v1012, 7
    %v1014 = vsub.s32 %v433, %v1013
    %v1015 = vrot.slane %v956, %v1014
    %v1016 = vlaneseq
    %v1017 = vshrl.u32 %v1016, 7
    %v1018 = vsub.s32 %v433, %v1017
    %v1019 = vrot.slane %v959, %v1018
    %v1020 = vlaneseq
    %v1021 = vshrl.u32 %v1020, 7
    %v1022 = vsub.s32 %v433, %v1021
    %v1023 = vrot.slane %v962, %v1022
    %v1024 = vlaneseq
    %v1025 = vshrl.u32 %v1024, 7
    %v1026 = vsub.s32 %v433, %v1025
    %v1027 = vrot.slane %v965, %v1026
    %v1028 = vlaneseq
    %v1029 = vshrl.u32 %v1028, 7
    %v1030 = vsub.s32 %v433, %v1029
    %v1031 = vrot.slane %v968, %v1030
    %v1032 = vlaneseq
    %v1033 = vshrl.u32 %v1032, 7
    %v1034 = vsub.s32 %v433, %v1033
    %v1035 = vrot.slane %v971, %v1034
    %v1036 = vsel %vm498, %v979, %v975
    %v1037 = vsel %vm500, %v983, %v1036
    %v1038 = vsel %vm502, %v987, %v1037
    %v1039 = vsel %vm504, %v991, %v1038
    %v1040 = vsel %vm506, %v995, %v1039
    %v1041 = vsel %vm508, %v999, %v1040
    %v1042 = vsel %vm510, %v1003, %v1041
    %v1043 = vsel %vm498, %v1011, %v1007
    %v1044 = vsel %vm500, %v1015, %v1043
    %v1045 = vsel %vm502, %v1019, %v1044
    %v1046 = vsel %vm504, %v1023, %v1045
    %v1047 = vsel %vm506, %v1027, %v1046
    %v1048 = vsel %vm508, %v1031, %v1047
    %v1049 = vsel %vm510, %v1035, %v1048
    %1052 = vst.msk [vmem:[#allocation7] sm:$0xff] %vm521, %v1042
    %1053 = vst.msk [vmem:[#allocation7 + $0x8] sm:$0xff] %vm521, %v1049
    // Predicated region
    $region26: #{tpu_custom_call.1} parent=1 // pred_check
      _
    $region27: #{tpu_custom_call.1} parent=1 // pred_check_branch
      %1055 = sbr.rel (0) target = $region29
    $region28: #{tpu_custom_call.1} parent=1 // pred_region
      %s1057 = ssub.s32 256, 256
      %1058 = vsyncadd [#allocation4], %s1057
      %s1059 = sshll.u32 [#allocation7], 4
      %s1060 = int_to_ptr.vmem [resolvable:$true] %s1059
      %1065 = dma.vmem_to_hbm [thread:$0]  %s1060, 256, %s4, [#allocation4], 128, 128, 8
    $region29: #{tpu_custom_call.1} parent=1 // pred_fallthru
      _
    // Predicated region
    $region30: #{tpu_custom_call.1} parent=1 // pred_check
      _
    $region31: #{tpu_custom_call.1} parent=1 // pred_check_branch
      %1067 = sbr.rel (0) target = $region33
    $region32: #{tpu_custom_call.1} parent=1 // pred_region
      %1068 = dma.done [#allocation4], 256
    $region33: #{tpu_custom_call.1} parent=1 // pred_fallthru
      _
    %1069 = vsyncpa [#allocation3], 1
    %1070 = vsyncpa [#allocation6], 1
    %1071 = vsyncpa [#allocation4], 1

</llo_original>
